<compile_context>
chip_gen: v5e
topology: v5e:2x2
jax: 0.10.0
libtpu: 0.0.40
codegen_flags: <defaults>
</compile_context>

<pallas_src>
import jax
import jax.numpy as jnp
from jax.experimental import pallas as pl
from jax.experimental.pallas import tpu as pltpu


_LANE = 128
_SUBLANE = 8


def _round_up(a, m):
    return -(-a // m) * m


def _device_kind():
    try:
        return jax.devices()[0].device_kind.lower()
    except Exception:
        return ""


def _vmem_capacity_bytes():
    try:
        info = pltpu.get_tpu_info()
        cap = getattr(info, "vmem_capacity_bytes", None)
        if cap:
            return int(cap)
    except Exception:
        pass
    kind = _device_kind()
    if "v7" in kind:
        return 64 << 20      # v7x: 64 MiB per TensorCore
    return 128 << 20         # v5e / v6e: 128 MiB


def _mxu_m():
    """MXU M-dimension granularity for tile_n rounding."""
    kind = _device_kind()
    if "v6" in kind or "v7" in kind:
        return 256           # 2x256x256 MXU
    return 128               # v5e-class: 128x128 MXU tiles


def _choose_tile_n(N, D_pad, C_pad, x_itemsize, c_itemsize, out_itemsize,
                   vmem_cap, *, sub_gran=_SUBLANE, mxu_m=256, min_steps=2):
    """Largest tile_n (<=1024) whose full footprint fits the VMEM budget."""
    budget = int(vmem_cap * 0.7)                      # headroom for compiler scratch
    center_bytes = C_pad * D_pad * c_itemsize         # single-buffered (Buffered(1))
    csq_bytes = C_pad * 4
    # Per-row footprint: double-buffered x / out I/O tiles + live in-kernel
    # f32 temporaries (f32 cast of x, xc, sq_dist/logits, e, ...).
    per_row = (2 * (D_pad * x_itemsize + C_pad * out_itemsize)
               + D_pad * 4 + 4 * C_pad * 4)
    avail = budget - center_bytes - csq_bytes - (4 << 20)
    avail = max(avail, per_row * sub_gran)            # see class-tiling TODO above
    tile_n = min(1024, avail // per_row)
    if tile_n >= mxu_m:
        tile_n = (tile_n // mxu_m) * mxu_m            # full MXU M passes
    else:
        tile_n = max(sub_gran, (tile_n // sub_gran) * sub_gran)
    n_ceil = _round_up(N, sub_gran)
    tile_n = min(tile_n, n_ceil)                      # don't over-tile small N
    # Ensure >=2 grid steps when N allows, so ("parallel",) shards across
    # v7x's two TensorCores (negligible cost on 1-TC v5e/v6e).
    if min_steps > 1 and n_ceil >= min_steps * sub_gran:
        per_step = _round_up(-(-n_ceil // min_steps), sub_gran)
        tile_n = min(tile_n, per_step)
    return int(max(sub_gran, tile_n))


def _proto_kernel(temperature):
    t = float(temperature)

    def kernel(x_ref, ct_ref, csq_ref, o_ref):
        x = x_ref[...]                                   # [TN, Dp] (native dtype)
        ct = ct_ref[...]                                 # [Dp, Cp] (pre-transposed)

        # x @ center^T on the MXU in the center's dtype (bf16 if the caller
        # opted into the bf16 cross-term), canonical [M,K] x [K,N] layout.
        xc = jax.lax.dot_general(
            x.astype(ct.dtype), ct, (((1,), (0,)), ((), ())),
            preferred_element_type=jnp.float32)          # [TN, Cp]

        # Row norms in f32 (VPU); ||center||^2 is a precomputed [1, Cp] row
        # (padded classes hold +1e30 so they get exactly 0 probability).
        xf = x.astype(jnp.float32)
        x_sq = jnp.sum(xf * xf, axis=1, keepdims=True)   # [TN, 1]
        c_sq = csq_ref[...]                              # [1, Cp]

        sq_dist = jnp.maximum(x_sq + c_sq - 2.0 * xc, 0.0)
        logits = -jnp.sqrt(sq_dist) * jnp.float32(t)

        # Row-wise softmax over the class axis (dim=1).  Exact reciprocal
        # (approx=False) so rows sum to 1; still an EUP op, negligible cost.
        m = jnp.max(logits, axis=1, keepdims=True)
        e = jnp.exp(logits - m)
        denom = jnp.sum(e, axis=1, keepdims=True)
        o_ref[...] = (e * pl.reciprocal(denom, approx=False)).astype(o_ref.dtype)

    return kernel


def proto_classifier_forward(x, center, temperature=1.0, *, tile_n=None,
                             out_dtype=None, mxu_bf16=False):
    """softmax(-cdist(x, center) * temperature, axis=1) via a Pallas TPU kernel.

    x:        [N, D] float32 or bfloat16
    center:   [C, D]
    out_dtype: defaults to x.dtype (matches torch softmax dtype behavior)
    mxu_bf16: opt-in bf16 cross-term for f32 inputs (norms/softmax stay f32)
    """
    assert temperature > 0, "padded-class masking requires temperature > 0"
    N, D = x.shape
    C, D2 = center.shape
    assert D == D2, "feature dims must match"
    out_dtype = jnp.dtype(x.dtype if out_dtype is None else out_dtype)

    # Pad feature (lane / MXU-K) axis and class (output lane / MXU-N) axis.
    D_pad = _round_up(D, _LANE)
    C_pad = _round_up(max(C, 1), _LANE)

    x_p = jnp.pad(x, ((0, 0), (0, D_pad - D))) if D_pad != D else x

    # Hoisted ||center||^2 row in f32 (from the unpadded centers).  Padded
    # classes get +1e30 -> logits ~ -1e15 -> exp underflows to exactly 0.
    c_sq = jnp.sum(center.astype(jnp.float32) ** 2, axis=1)
    if C_pad != C:
        c_sq = jnp.concatenate(
            [c_sq, jnp.full((C_pad - C,), 1e30, dtype=jnp.float32)])
    c_sq = c_sq[None, :]                                 # [1, C_pad]

    # Pre-transposed prototypes [D_pad, C_pad]: the MXU's native RHS layout,
    # so Mosaic never relayouts the center inside the grid loop.
    ct = center.T
    if mxu_bf16 and ct.dtype == jnp.float32:
        ct = ct.astype(jnp.bfloat16)                     # cross-term only
    ct_p = jnp.pad(ct, ((0, D_pad - D), (0, C_pad - C)))

    sub_gran = 16 if x_p.dtype == jnp.bfloat16 else _SUBLANE
    x_itemsize = x_p.dtype.itemsize
    c_itemsize = ct_p.dtype.itemsize
    out_itemsize = out_dtype.itemsize
    vmem_cap = _vmem_capacity_bytes()

    if tile_n is None:
        tile_n = _choose_tile_n(N, D_pad, C_pad, x_itemsize, c_itemsize,
                                out_itemsize, vmem_cap,
                                sub_gran=sub_gran, mxu_m=_mxu_m())
    tile_n = max(sub_gran, _round_up(int(tile_n), sub_gran))

    N_pad = _round_up(N, tile_n)
    if N_pad != N:
        x_p = jnp.pad(x_p, ((0, N_pad - N), (0, 0)))
    grid = (N_pad // tile_n,)

    # Explicit VMEM limit from the same footprint model (single-buffered
    # center + c_sq, double-buffered x/out tiles, f32 temporaries, slack).
    center_bytes = C_pad * D_pad * c_itemsize + C_pad * 4
    io_bytes = 2 * tile_n * (D_pad * x_itemsize + C_pad * out_itemsize)
    tmp_bytes = tile_n * (D_pad * 4 + 4 * C_pad * 4)
    vmem_limit = int(min(max(center_bytes + io_bytes + tmp_bytes + (4 << 20),
                             16 << 20), vmem_cap))

    kernel = _proto_kernel(float(temperature))
    out_shape = jax.ShapeDtypeStruct((N_pad, C_pad), out_dtype)
    cparams = pltpu.CompilerParams(
        dimension_semantics=("parallel",),
        vmem_limit_bytes=vmem_limit,
    )

    def run(single_buffer_const):
        const_kw = {}
        if single_buffer_const:
            # Grid-invariant inputs: single VMEM buffer (index_map is constant,
            # double-buffering would only waste resident VMEM).
            const_kw = dict(pipeline_mode=pl.Buffered(1))
        in_specs = [
            pl.BlockSpec((tile_n, D_pad), lambda i: (i, 0)),              # x tile
            pl.BlockSpec((D_pad, C_pad), lambda i: (0, 0), **const_kw),   # center^T
            pl.BlockSpec((1, C_pad), lambda i: (0, 0), **const_kw),       # ||c||^2
        ]
        return pl.pallas_call(
            kernel,
            out_shape=out_shape,
            grid_spec=pltpu.PrefetchScalarGridSpec(
                num_scalar_prefetch=0,
                grid=grid,
                in_specs=in_specs,
                out_specs=pl.BlockSpec((tile_n, C_pad), lambda i: (i, 0)),
            ),
            compiler_params=cparams,
        )(x_p, ct_p, c_sq)

    if hasattr(pl, "Buffered"):
        try:
            out_p = run(True)
        except Exception:
            # pl.Buffered(1) not supported on this jax/backend combination:
            # fall back to default double-buffering (correctness unchanged).
            out_p = run(False)
    else:
        out_p = run(False)

    return out_p[:N, :C]


def _reference(x, center, temperature=1.0):
    # Pure-JAX reference mirroring torch.cdist + F.softmax.
    diff = x[:, None, :] - center[None, :, :]
    dist = jnp.sqrt(jnp.sum(diff * diff, axis=-1))
    return jax.nn.softmax(-dist * temperature, axis=1)


if __name__ == "__main__":
    key = jax.random.PRNGKey(0)
    k_x, k_c = jax.random.split(key)

    # Small shapes consistent with the forward pass: N samples, D features,
    # num_classes prototypes.
    N, D, num_classes = 8, 32, 4
    x = jax.random.normal(k_x, (N, D), dtype=jnp.float32)
    # Deterministic synthetic prototypes (would normally come from .init()).
    center = jax.random.normal(k_c, (num_classes, D), dtype=jnp.float32)

    out = proto_classifier_forward(x, center, temperature=1.0)
    out = jax.block_until_ready(out)

    ref = _reference(x, center, temperature=1.0)
    assert out.shape == (N, num_classes)
    assert jnp.allclose(out, ref, atol=1e-3, rtol=1e-3), "mismatch vs reference"
    # Exact reciprocal -> rows sum to 1 up to f32 rounding.
    assert jnp.allclose(jnp.sum(out, axis=1), 1.0, atol=1e-4), "rows must sum to 1"

    print("KERNEL_OK")
</pallas_src>

<mosaic_0001>
module attributes {stable_mosaic.version = 11 : i64} {
  func.func @kernel(%arg0: i32, %arg1: memref<8x128xf32, #tpu.memory_space<vmem>>, %arg2: memref<128x128xf32, #tpu.memory_space<vmem>>, %arg3: memref<1x128xf32, #tpu.memory_space<vmem>>, %arg4: memref<8x128xf32, #tpu.memory_space<vmem>>) attributes {dimension_semantics = [#tpu.dimension_semantics<parallel>], iteration_bounds = array<i64: 1>, scalar_prefetch = 0 : i64, scratch_operands = 0 : i64, tpu.core_type = #tpu.core_type<tc>, window_params = [{transform_indices = @transform_0, window_bounds = array<i64: 8, 128>}, {pipeline_mode = #tpu.pipeline_mode<synchronous>, transform_indices = @transform_1, window_bounds = array<i64: 128, 128>}, {pipeline_mode = #tpu.pipeline_mode<synchronous>, transform_indices = @transform_2, window_bounds = array<i64: 1, 128>}, {transform_indices = @transform_3, window_bounds = array<i64: 8, 128>}]} {
    %c0 = arith.constant 0 : index
    %c0_0 = arith.constant 0 : index
    %0 = vector.load %arg1[%c0, %c0_0] : memref<8x128xf32, #tpu.memory_space<vmem>>, vector<8x128xf32>
    %c0_1 = arith.constant 0 : index
    %c0_2 = arith.constant 0 : index
    %1 = vector.load %arg2[%c0_1, %c0_2] : memref<128x128xf32, #tpu.memory_space<vmem>>, vector<128x128xf32>
    %cst = arith.constant dense<0.000000e+00> : vector<8x128xf32>
    %2 = tpu.matmul %0, %1, %cst {dimension_numbers = #tpu.dot_dimension_numbers<[1], [0], [0], [1], [0, 0, 1, 1], [], []>} : vector<8x128xf32>, vector<128x128xf32>, vector<8x128xf32> -> vector<8x128xf32>
    %3 = arith.mulf %0, %0 : vector<8x128xf32>
    %cst_3 = arith.constant dense<0.000000e+00> : vector<8xf32>
    %4 = vector.multi_reduction <add>, %3, %cst_3 [1] : vector<8x128xf32> to vector<8xf32>
    %5 = vector.shape_cast %4 : vector<8xf32> to vector<8x1xf32>
    %c0_4 = arith.constant 0 : index
    %c0_5 = arith.constant 0 : index
    %6 = vector.load %arg3[%c0_4, %c0_5] : memref<1x128xf32, #tpu.memory_space<vmem>>, vector<1x128xf32>
    %7 = vector.broadcast %5 : vector<8x1xf32> to vector<8x128xf32>
    %8 = vector.broadcast %6 : vector<1x128xf32> to vector<8x128xf32>
    %9 = arith.addf %7, %8 : vector<8x128xf32>
    %cst_6 = arith.constant 2.000000e+00 : f32
    %10 = vector.broadcast %cst_6 : f32 to vector<8x128xf32>
    %11 = arith.mulf %10, %2 : vector<8x128xf32>
    %12 = arith.subf %9, %11 : vector<8x128xf32>
    %cst_7 = arith.constant 0.000000e+00 : f32
    %13 = vector.broadcast %cst_7 : f32 to vector<8x128xf32>
    %14 = arith.maximumf %12, %13 : vector<8x128xf32>
    %15 = math.sqrt %14 : vector<8x128xf32>
    %cst_8 = arith.constant 0.000000e+00 : f32
    %16 = vector.broadcast %cst_8 : f32 to vector<8x128xf32>
    %17 = arith.subf %16, %15 : vector<8x128xf32>
    %cst_9 = arith.constant 1.000000e+00 : f32
    %18 = vector.broadcast %cst_9 : f32 to vector<8x128xf32>
    %19 = arith.mulf %17, %18 : vector<8x128xf32>
    %cst_10 = arith.constant dense<0xFF800000> : vector<8xf32>
    %20 = vector.multi_reduction <maximumf>, %19, %cst_10 [1] : vector<8x128xf32> to vector<8xf32>
    %21 = vector.shape_cast %20 : vector<8xf32> to vector<8x1xf32>
    %22 = vector.broadcast %21 : vector<8x1xf32> to vector<8x128xf32>
    %23 = arith.subf %19, %22 : vector<8x128xf32>
    %24 = math.exp %23 : vector<8x128xf32>
    %cst_11 = arith.constant dense<0.000000e+00> : vector<8xf32>
    %25 = vector.multi_reduction <add>, %24, %cst_11 [1] : vector<8x128xf32> to vector<8xf32>
    %26 = vector.shape_cast %25 : vector<8xf32> to vector<8x1xf32>
    %27 = tpu.reciprocal %26 : vector<8x1xf32> -> vector<8x1xf32>
    %28 = vector.broadcast %27 : vector<8x1xf32> to vector<8x128xf32>
    %29 = arith.mulf %24, %28 : vector<8x128xf32>
    %c0_12 = arith.constant 0 : index
    %c0_13 = arith.constant 0 : index
    %30 = vector.load %arg4[%c0_12, %c0_13] : memref<8x128xf32, #tpu.memory_space<vmem>>, vector<8x128xf32>
    tpu.vector_store %arg4[%c0_12, %c0_13], %29 {strides = array<i32>} : memref<8x128xf32, #tpu.memory_space<vmem>>, vector<8x128xf32>,
    return
  }
  func.func @transform_0(%arg0: i32) -> (i32, i32) {
    %c0_i32 = arith.constant 0 : i32
    %c0_i32_0 = arith.constant 0 : i32
    return %arg0, %c0_i32 : i32, i32
  }
  func.func @transform_1(%arg0: i32) -> (i32, i32) {
    %c0_i32 = arith.constant 0 : i32
    %c0_i32_0 = arith.constant 0 : i32
    %c0_i32_1 = arith.constant 0 : i32
    return %c0_i32, %c0_i32_0 : i32, i32
  }
  func.func @transform_2(%arg0: i32) -> (i32, i32) {
    %c0_i32 = arith.constant 0 : i32
    %c0_i32_0 = arith.constant 0 : i32
    %c0_i32_1 = arith.constant 0 : i32
    return %c0_i32, %c0_i32_0 : i32, i32
  }
  func.func @transform_3(%arg0: i32) -> (i32, i32) {
    %c0_i32 = arith.constant 0 : i32
    %c0_i32_0 = arith.constant 0 : i32
    return %arg0, %c0_i32 : i32, i32
  }
}

module attributes {stable_mosaic.version = 11 : i64} {
  func.func @kernel(%arg0: i32, %arg1: memref<8x128xf32, #tpu.memory_space<vmem>>, %arg2: memref<128x128xf32, #tpu.memory_space<vmem>>, %arg3: memref<1x128xf32, #tpu.memory_space<vmem>>, %arg4: memref<8x128xf32, #tpu.memory_space<vmem>>) attributes {dimension_semantics = [#tpu.dimension_semantics<parallel>], iteration_bounds = array<i64: 1>, scalar_prefetch = 0 : i64, scratch_operands = 0 : i64, tpu.core_type = #tpu.core_type<tc>, window_params = [{transform_indices = @transform_0, window_bounds = array<i64: 8, 128>}, {pipeline_mode = #tpu.pipeline_mode<synchronous>, transform_indices = @transform_1, window_bounds = array<i64: 128, 128>}, {pipeline_mode = #tpu.pipeline_mode<synchronous>, transform_indices = @transform_2, window_bounds = array<i64: 1, 128>}, {transform_indices = @transform_3, window_bounds = array<i64: 8, 128>}]} {
    %c0 = arith.constant 0 : index
    %c0_0 = arith.constant 0 : index
    %0 = vector.load %arg1[%c0, %c0_0] : memref<8x128xf32, #tpu.memory_space<vmem>>, vector<8x128xf32>
    %c0_1 = arith.constant 0 : index
    %c0_2 = arith.constant 0 : index
    %1 = vector.load %arg2[%c0_1, %c0_2] : memref<128x128xf32, #tpu.memory_space<vmem>>, vector<128x128xf32>
    %cst = arith.constant dense<0.000000e+00> : vector<8x128xf32>
    %2 = tpu.matmul %0, %1, %cst {dimension_numbers = #tpu.dot_dimension_numbers<[1], [0], [0], [1], [0, 0, 1, 1], [], []>} : vector<8x128xf32>, vector<128x128xf32>, vector<8x128xf32> -> vector<8x128xf32>
    %3 = arith.mulf %0, %0 : vector<8x128xf32>
    %cst_3 = arith.constant dense<0.000000e+00> : vector<8xf32>
    %4 = vector.multi_reduction <add>, %3, %cst_3 [1] : vector<8x128xf32> to vector<8xf32>
    %5 = vector.shape_cast %4 : vector<8xf32> to vector<8x1xf32>
    %c0_4 = arith.constant 0 : index
    %c0_5 = arith.constant 0 : index
    %6 = vector.load %arg3[%c0_4, %c0_5] : memref<1x128xf32, #tpu.memory_space<vmem>>, vector<1x128xf32>
    %7 = vector.broadcast %5 : vector<8x1xf32> to vector<8x128xf32>
    %8 = vector.broadcast %6 : vector<1x128xf32> to vector<8x128xf32>
    %9 = arith.addf %7, %8 : vector<8x128xf32>
    %cst_6 = arith.constant 2.000000e+00 : f32
    %10 = vector.broadcast %cst_6 : f32 to vector<8x128xf32>
    %11 = arith.mulf %10, %2 : vector<8x128xf32>
    %12 = arith.subf %9, %11 : vector<8x128xf32>
    %cst_7 = arith.constant 0.000000e+00 : f32
    %13 = vector.broadcast %cst_7 : f32 to vector<8x128xf32>
    %14 = arith.maximumf %12, %13 : vector<8x128xf32>
    %15 = math.sqrt %14 : vector<8x128xf32>
    %cst_8 = arith.constant 0.000000e+00 : f32
    %16 = vector.broadcast %cst_8 : f32 to vector<8x128xf32>
    %17 = arith.subf %16, %15 : vector<8x128xf32>
    %cst_9 = arith.constant 1.000000e+00 : f32
    %18 = vector.broadcast %cst_9 : f32 to vector<8x128xf32>
    %19 = arith.mulf %17, %18 : vector<8x128xf32>
    %cst_10 = arith.constant dense<0xFF800000> : vector<8xf32>
    %20 = vector.multi_reduction <maximumf>, %19, %cst_10 [1] : vector<8x128xf32> to vector<8xf32>
    %21 = vector.shape_cast %20 : vector<8xf32> to vector<8x1xf32>
    %22 = vector.broadcast %21 : vector<8x1xf32> to vector<8x128xf32>
    %23 = arith.subf %19, %22 : vector<8x128xf32>
    %24 = math.exp %23 : vector<8x128xf32>
    %cst_11 = arith.constant dense<0.000000e+00> : vector<8xf32>
    %25 = vector.multi_reduction <add>, %24, %cst_11 [1] : vector<8x128xf32> to vector<8xf32>
    %26 = vector.shape_cast %25 : vector<8xf32> to vector<8x1xf32>
    %27 = tpu.reciprocal %26 : vector<8x1xf32> -> vector<8x1xf32>
    %28 = vector.broadcast %27 : vector<8x1xf32> to vector<8x128xf32>
    %29 = arith.mulf %24, %28 : vector<8x128xf32>
    %c0_12 = arith.constant 0 : index
    %c0_13 = arith.constant 0 : index
    %30 = vector.load %arg4[%c0_12, %c0_13] : memref<8x128xf32, #tpu.memory_space<vmem>>, vector<8x128xf32>
    tpu.vector_store %arg4[%c0_12, %c0_13], %29 {strides = array<i32>} : memref<8x128xf32, #tpu.memory_space<vmem>>, vector<8x128xf32>,
    return
  }
  func.func @transform_0(%arg0: i32) -> (i32, i32) {
    %c0_i32 = arith.constant 0 : i32
    %c0_i32_0 = arith.constant 0 : i32
    return %arg0, %c0_i32 : i32, i32
  }
  func.func @transform_1(%arg0: i32) -> (i32, i32) {
    %c0_i32 = arith.constant 0 : i32
    %c0_i32_0 = arith.constant 0 : i32
    %c0_i32_1 = arith.constant 0 : i32
    return %c0_i32, %c0_i32_0 : i32, i32
  }
  func.func @transform_2(%arg0: i32) -> (i32, i32) {
    %c0_i32 = arith.constant 0 : i32
    %c0_i32_0 = arith.constant 0 : i32
    %c0_i32_1 = arith.constant 0 : i32
    return %c0_i32, %c0_i32_0 : i32, i32
  }
  func.func @transform_3(%arg0: i32) -> (i32, i32) {
    %c0_i32 = arith.constant 0 : i32
    %c0_i32_0 = arith.constant 0 : i32
    return %arg0, %c0_i32 : i32, i32
  }
}

</mosaic_0001>

<llo_original>
// kernel: tpu_custom_call.1
$region0: #{tpu_custom_call.1}
  #allocation0 [shape = 'u32[]', space=smem, size = 0x4, offset = 0x4, fixed_abs, tag = 'smem constant byte address 0x4 - core index']
  #allocation1 [shape = 'u32[72,128]{1,0:T(1,128)}', space=vmem, size = 0x9000, scoped, tag = 'internal scratch']
  %s0 = inlined_call_operand.hbm [shape: f32[8,128], index: 0, kind: input, shape index: {}]
  %s1 = inlined_call_operand.hbm [shape: f32[128,128], index: 1, kind: input, shape index: {}]
  %s2 = inlined_call_operand.vmem [shape: f32[1,128], index: 2, kind: input, shape index: {}]
  %s3 = inlined_call_operand.hbm [shape: f32[8,128], index: 3, kind: output, shape index: {}]
  %s4 = sld [smem:[#allocation0]]
  $region30: #{tpu_custom_call.1} parent=0
    _
  %s6 = ssub.s32 1, %s4
  %s7 = scalar_select 0, %s6, %s4
  $region1: #{tpu_custom_call.1} parent=0
    #allocation2 [shape = 'u8[4096]{0}', space=vmem, size = 0x1000, scoped, tag = 'input window, operand 0, single buffered']
    #allocation3 [shape = 's32[1]{0}', space=sflag, size = 0x4, scoped, tag = 'scoped memory for tpu_custom_call.1']
    #allocation4 [shape = 's32[1]{0}', space=sflag, size = 0x4, scoped, tag = 'scoped memory for tpu_custom_call.1']
    #allocation5 [shape = 'u8[65536]{0}', space=vmem, size = 0x10000, scoped, tag = 'input window, operand 1, single buffered']
    #allocation6 [shape = 's32[1]{0}', space=sflag, size = 0x4, scoped, tag = 'scoped memory for tpu_custom_call.1']
    #allocation7 [shape = 'u8[4096]{0}', space=vmem, size = 0x1000, scoped, tag = 'output window, operand 0, single buffered']
    %8 = vsyncpa [#allocation3], 0
    %9 = vsyncpa [#allocation6], 0
    %10 = vsyncpa [#allocation4], 0
    // Predicated region
    $region2: #{tpu_custom_call.1} parent=1 // pred_check
      _
    $region3: #{tpu_custom_call.1} parent=1 // pred_check_branch
      %12 = sbr.rel (0) target = $region5
    $region4: #{tpu_custom_call.1} parent=1 // pred_region
      %14 = vsyncadd [#allocation3], 0
      %s16 = sshll.u32 %s0, 4
      %s17 = int_to_ptr.hbm [resolvable:$true] %s16
      %s18 = sshll.u32 [#allocation2], 4
      %s19 = int_to_ptr.vmem [resolvable:$true] %s18
      %21 = dma.hbm_to_vmem [thread:$0]  %s17, 128, %s19, [#allocation3]
    $region5: #{tpu_custom_call.1} parent=1 // pred_fallthru
      _
    // Predicated region
    $region6: #{tpu_custom_call.1} parent=1 // pred_check
      _
    $region7: #{tpu_custom_call.1} parent=1 // pred_check_branch
      %23 = sbr.rel (0) target = $region9
    $region8: #{tpu_custom_call.1} parent=1 // pred_region
      %25 = vsyncadd [#allocation6], 0
      %s26 = sshll.u32 %s1, 4
      %s27 = int_to_ptr.hbm [resolvable:$true] %s26
      %s28 = sshll.u32 [#allocation5], 4
      %s29 = int_to_ptr.vmem [resolvable:$true] %s28
      %34 = dma.hbm_to_vmem [thread:$0]  %s27, 2048, %s29, [#allocation6], 128, 128, 8
    $region9: #{tpu_custom_call.1} parent=1 // pred_fallthru
      _
    // Predicated region
    $region10: #{tpu_custom_call.1} parent=1 // pred_check
      _
    $region11: #{tpu_custom_call.1} parent=1 // pred_check_branch
      %36 = sbr.rel (0) target = $region13
    $region12: #{tpu_custom_call.1} parent=1 // pred_region
      _
    $region13: #{tpu_custom_call.1} parent=1 // pred_fallthru
      _
    // Predicated region
    $region14: #{tpu_custom_call.1} parent=1 // pred_check
      _
    $region15: #{tpu_custom_call.1} parent=1 // pred_check_branch
      %38 = sbr.rel (0) target = $region17
    $region16: #{tpu_custom_call.1} parent=1 // pred_region
      %40 = dma.done [#allocation3], 128
    $region17: #{tpu_custom_call.1} parent=1 // pred_fallthru
      _
    // Predicated region
    $region18: #{tpu_custom_call.1} parent=1 // pred_check
      _
    $region19: #{tpu_custom_call.1} parent=1 // pred_check_branch
      %42 = sbr.rel (0) target = $region21
    $region20: #{tpu_custom_call.1} parent=1 // pred_region
      %44 = dma.done [#allocation6], 2048
    $region21: #{tpu_custom_call.1} parent=1 // pred_fallthru
      _
    %v45 = vld [vmem:[#allocation2] sm:$0xff]
    %v46 = vld [vmem:[#allocation5] sm:$0xff]
    %v47 = vld [vmem:[#allocation5 + $0x8] sm:$0xff]
    %v48 = vld [vmem:[#allocation5 + $0x10] sm:$0xff]
    %v49 = vld [vmem:[#allocation5 + $0x18] sm:$0xff]
    %v50 = vld [vmem:[#allocation5 + $0x20] sm:$0xff]
    %v51 = vld [vmem:[#allocation5 + $0x28] sm:$0xff]
    %v52 = vld [vmem:[#allocation5 + $0x30] sm:$0xff]
    %v53 = vld [vmem:[#allocation5 + $0x38] sm:$0xff]
    %v54 = vld [vmem:[#allocation5 + $0x40] sm:$0xff]
    %v55 = vld [vmem:[#allocation5 + $0x48] sm:$0xff]
    %v56 = vld [vmem:[#allocation5 + $0x50] sm:$0xff]
    %v57 = vld [vmem:[#allocation5 + $0x58] sm:$0xff]
    %v58 = vld [vmem:[#allocation5 + $0x60] sm:$0xff]
    %v59 = vld [vmem:[#allocation5 + $0x68] sm:$0xff]
    %v60 = vld [vmem:[#allocation5 + $0x70] sm:$0xff]
    %v61 = vld [vmem:[#allocation5 + $0x78] sm:$0xff]
    %62 = vmatpush.msra.mxu0 %v61
    %63 = vmatpush.msra.mxu0 %v60
    %64 = vmatpush.msra.mxu0 %v59
    %65 = vmatpush.msra.mxu0 %v58
    %66 = vmatpush.msra.mxu0 %v57
    %67 = vmatpush.msra.mxu0 %v56
    %68 = vmatpush.msra.mxu0 %v55
    %69 = vmatpush.msra.mxu0 %v54
    %70 = vmatpush.msra.mxu0 %v53
    %71 = vmatpush.msra.mxu0 %v52
    %72 = vmatpush.msra.mxu0 %v51
    %73 = vmatpush.msra.mxu0 %v50
    %74 = vmatpush.msra.mxu0 %v49
    %75 = vmatpush.msra.mxu0 %v48
    %76 = vmatpush.msra.mxu0 %v47
    %77 = vmatpush.msra.mxu0 %v46
    %78 = vmatmul.f32.gmra.mxu0 %v45
    %v79 = vpop.f32.mrf.mxu0
    %v80 = vadd.f32 0.0, %v79
    %81 = vdwg.mxu0
    %v82 = vmul.f32 %v45, %v45
    %83 = vadd.xlane.f32.xlu0 %v82
    %v84 = vpop.xlane.xlu0 %83
    %v85 = vld [vmem:[%s2] sm:$0x1]
    %v87 = vperm.slane %v85, 0
    %v89 = vadd.f32 %v84, %v87
    %v90 = vmul.f32 %v80, 2.0
    %v91 = vsub.f32 %v89, %v90
    %v92 = vmax.f32 %v91, 0.0
    %v93 = vrsqrt.pop %v92
    %v94 = vmul.f32 %v93, %v92
    %v95 = vmul.f32 %v94, %v93
    %v96 = vmul.f32 0.5, %v95
    %v97 = vsub.f32 1.5, %v96
    %v98 = vmul.f32 %v93, %v97
    %v99 = vmul.f32 %v92, %v98
    %vm100 = vcmp.eq.f32.partialorder %v92, inf
    %v101 = vsel %vm100, %v92, %v99
    %vm102 = vcmp.eq.f32.partialorder %v92, 0.0
    %v103 = vand.u32 %v92, 2147483648
    %v104 = vsel %vm102, %v103, %v101
    %v105 = vsub.f32 0.0, %v104
    %106 = vmax.xlane.f32.xlu0 %v105
    %v107 = vpop.xlane.xlu0 %106
    %v108 = vsub.f32 %v105, %v107
    %v109 = vmul.f32 %v108, 1.442695
    %v110 = vpow.pop %v109
    %111 = vadd.xlane.f32.xlu0 %v110
    %v112 = vpop.xlane.xlu0 %111
    %v113 = vrcp.pop %v112
    %v114 = vmul.f32 %v112, %v113
    %v115 = vsub.f32 1.0, %v114
    %v116 = vmul.f32 %v113, %v115
    %v117 = vadd.f32 %v113, %v116
    %vm118 = vweird.f32 %v112
    %vm119 = vweird.f32 %v113
    %vm120 = vmor %vm118, %vm119
    %v121 = vsel %vm120, %v113, %v117
    %v122 = vand.u32 2147483647, %v112
    %vm123 = vcmp.eq.f32.partialorder %v122, 8.507059e+37
    %v124 = vand.u32 %v112, 2147483648
    %v125 = vor.u32 1.1754944e-38, %v124
    %v126 = vsel %vm123, %v125, %v121
    %v127 = vmul.f32 %v110, %v126
    %128 = vst [vmem:[#allocation7] sm:$0xff] %v127
    // Predicated region
    $region22: #{tpu_custom_call.1} parent=1 // pred_check
      _
    $region23: #{tpu_custom_call.1} parent=1 // pred_check_branch
      %130 = sbr.rel (0) target = $region25
    $region24: #{tpu_custom_call.1} parent=1 // pred_region
      %132 = vsyncadd [#allocation4], 0
      %s134 = sshll.u32 [#allocation7], 4
      %s135 = int_to_ptr.vmem [resolvable:$true] %s134
      %s136 = sshll.u32 %s3, 4
      %s137 = int_to_ptr.hbm [resolvable:$true] %s136
      %139 = dma.vmem_to_hbm [thread:$0]  %s135, 128, %s137, [#allocation4]
    $region25: #{tpu_custom_call.1} parent=1 // pred_fallthru
      _
    // Predicated region
    $region26: #{tpu_custom_call.1} parent=1 // pred_check
      _
    $region27: #{tpu_custom_call.1} parent=1 // pred_check_branch
      %141 = sbr.rel (0) target = $region29
    $region28: #{tpu_custom_call.1} parent=1 // pred_region
      %143 = dma.done [#allocation4], 128
    $region29: #{tpu_custom_call.1} parent=1 // pred_fallthru
      _
    %144 = vsyncpa [#allocation3], 1
    %145 = vsyncpa [#allocation6], 1
    %146 = vsyncpa [#allocation4], 1

// kernel: tpu_custom_call.1
$region0: #{tpu_custom_call.1}
  #allocation0 [shape = 'u32[]', space=smem, size = 0x4, offset = 0x4, fixed_abs, tag = 'smem constant byte address 0x4 - core index']
  #allocation1 [shape = 'u32[72,128]{1,0:T(1,128)}', space=vmem, size = 0x9000, scoped, tag = 'internal scratch']
  %s0 = inlined_call_operand.hbm [shape: f32[8,128], index: 0, kind: input, shape index: {}]
  %s1 = inlined_call_operand.hbm [shape: f32[128,128], index: 1, kind: input, shape index: {}]
  %s2 = inlined_call_operand.vmem [shape: f32[1,128], index: 2, kind: input, shape index: {}]
  %s3 = inlined_call_operand.hbm [shape: f32[8,128], index: 3, kind: output, shape index: {}]
  %s4 = sld [smem:[#allocation0]]
  $region30: #{tpu_custom_call.1} parent=0
    _
  %s6 = ssub.s32 1, %s4
  %s7 = scalar_select 0, %s6, %s4
  $region1: #{tpu_custom_call.1} parent=0
    #allocation2 [shape = 'u8[4096]{0}', space=vmem, size = 0x1000, scoped, tag = 'input window, operand 0, single buffered']
    #allocation3 [shape = 's32[1]{0}', space=sflag, size = 0x4, scoped, tag = 'scoped memory for tpu_custom_call.1']
    #allocation4 [shape = 's32[1]{0}', space=sflag, size = 0x4, scoped, tag = 'scoped memory for tpu_custom_call.1']
    #allocation5 [shape = 'u8[65536]{0}', space=vmem, size = 0x10000, scoped, tag = 'input window, operand 1, single buffered']
    #allocation6 [shape = 's32[1]{0}', space=sflag, size = 0x4, scoped, tag = 'scoped memory for tpu_custom_call.1']
    #allocation7 [shape = 'u8[4096]{0}', space=vmem, size = 0x1000, scoped, tag = 'output window, operand 0, single buffered']
    %8 = vsyncpa [#allocation3], 0
    %9 = vsyncpa [#allocation6], 0
    %10 = vsyncpa [#allocation4], 0
    // Predicated region
    $region2: #{tpu_custom_call.1} parent=1 // pred_check
      _
    $region3: #{tpu_custom_call.1} parent=1 // pred_check_branch
      %12 = sbr.rel (0) target = $region5
    $region4: #{tpu_custom_call.1} parent=1 // pred_region
      %14 = vsyncadd [#allocation3], 0
      %s16 = sshll.u32 %s0, 4
      %s17 = int_to_ptr.hbm [resolvable:$true] %s16
      %s18 = sshll.u32 [#allocation2], 4
      %s19 = int_to_ptr.vmem [resolvable:$true] %s18
      %21 = dma.hbm_to_vmem [thread:$0]  %s17, 128, %s19, [#allocation3]
    $region5: #{tpu_custom_call.1} parent=1 // pred_fallthru
      _
    // Predicated region
    $region6: #{tpu_custom_call.1} parent=1 // pred_check
      _
    $region7: #{tpu_custom_call.1} parent=1 // pred_check_branch
      %23 = sbr.rel (0) target = $region9
    $region8: #{tpu_custom_call.1} parent=1 // pred_region
      %25 = vsyncadd [#allocation6], 0
      %s26 = sshll.u32 %s1, 4
      %s27 = int_to_ptr.hbm [resolvable:$true] %s26
      %s28 = sshll.u32 [#allocation5], 4
      %s29 = int_to_ptr.vmem [resolvable:$true] %s28
      %34 = dma.hbm_to_vmem [thread:$0]  %s27, 2048, %s29, [#allocation6], 128, 128, 8
    $region9: #{tpu_custom_call.1} parent=1 // pred_fallthru
      _
    // Predicated region
    $region10: #{tpu_custom_call.1} parent=1 // pred_check
      _
    $region11: #{tpu_custom_call.1} parent=1 // pred_check_branch
      %36 = sbr.rel (0) target = $region13
    $region12: #{tpu_custom_call.1} parent=1 // pred_region
      _
    $region13: #{tpu_custom_call.1} parent=1 // pred_fallthru
      _
    // Predicated region
    $region14: #{tpu_custom_call.1} parent=1 // pred_check
      _
    $region15: #{tpu_custom_call.1} parent=1 // pred_check_branch
      %38 = sbr.rel (0) target = $region17
    $region16: #{tpu_custom_call.1} parent=1 // pred_region
      %40 = dma.done [#allocation3], 128
    $region17: #{tpu_custom_call.1} parent=1 // pred_fallthru
      _
    // Predicated region
    $region18: #{tpu_custom_call.1} parent=1 // pred_check
      _
    $region19: #{tpu_custom_call.1} parent=1 // pred_check_branch
      %42 = sbr.rel (0) target = $region21
    $region20: #{tpu_custom_call.1} parent=1 // pred_region
      %44 = dma.done [#allocation6], 2048
    $region21: #{tpu_custom_call.1} parent=1 // pred_fallthru
      _
    %v45 = vld [vmem:[#allocation2] sm:$0xff]
    %v46 = vld [vmem:[#allocation5] sm:$0xff]
    %v47 = vld [vmem:[#allocation5 + $0x8] sm:$0xff]
    %v48 = vld [vmem:[#allocation5 + $0x10] sm:$0xff]
    %v49 = vld [vmem:[#allocation5 + $0x18] sm:$0xff]
    %v50 = vld [vmem:[#allocation5 + $0x20] sm:$0xff]
    %v51 = vld [vmem:[#allocation5 + $0x28] sm:$0xff]
    %v52 = vld [vmem:[#allocation5 + $0x30] sm:$0xff]
    %v53 = vld [vmem:[#allocation5 + $0x38] sm:$0xff]
    %v54 = vld [vmem:[#allocation5 + $0x40] sm:$0xff]
    %v55 = vld [vmem:[#allocation5 + $0x48] sm:$0xff]
    %v56 = vld [vmem:[#allocation5 + $0x50] sm:$0xff]
    %v57 = vld [vmem:[#allocation5 + $0x58] sm:$0xff]
    %v58 = vld [vmem:[#allocation5 + $0x60] sm:$0xff]
    %v59 = vld [vmem:[#allocation5 + $0x68] sm:$0xff]
    %v60 = vld [vmem:[#allocation5 + $0x70] sm:$0xff]
    %v61 = vld [vmem:[#allocation5 + $0x78] sm:$0xff]
    %62 = vmatpush.msra.mxu0 %v61
    %63 = vmatpush.msra.mxu0 %v60
    %64 = vmatpush.msra.mxu0 %v59
    %65 = vmatpush.msra.mxu0 %v58
    %66 = vmatpush.msra.mxu0 %v57
    %67 = vmatpush.msra.mxu0 %v56
    %68 = vmatpush.msra.mxu0 %v55
    %69 = vmatpush.msra.mxu0 %v54
    %70 = vmatpush.msra.mxu0 %v53
    %71 = vmatpush.msra.mxu0 %v52
    %72 = vmatpush.msra.mxu0 %v51
    %73 = vmatpush.msra.mxu0 %v50
    %74 = vmatpush.msra.mxu0 %v49
    %75 = vmatpush.msra.mxu0 %v48
    %76 = vmatpush.msra.mxu0 %v47
    %77 = vmatpush.msra.mxu0 %v46
    %78 = vmatmul.f32.gmra.mxu0 %v45
    %v79 = vpop.f32.mrf.mxu0
    %v80 = vadd.f32 0.0, %v79
    %81 = vdwg.mxu0
    %v82 = vmul.f32 %v45, %v45
    %83 = vadd.xlane.f32.xlu0 %v82
    %v84 = vpop.xlane.xlu0 %83
    %v85 = vld [vmem:[%s2] sm:$0x1]
    %v87 = vperm.slane %v85, 0
    %v89 = vadd.f32 %v84, %v87
    %v90 = vmul.f32 %v80, 2.0
    %v91 = vsub.f32 %v89, %v90
    %v92 = vmax.f32 %v91, 0.0
    %v93 = vrsqrt.pop %v92
    %v94 = vmul.f32 %v93, %v92
    %v95 = vmul.f32 %v94, %v93
    %v96 = vmul.f32 0.5, %v95
    %v97 = vsub.f32 1.5, %v96
    %v98 = vmul.f32 %v93, %v97
    %v99 = vmul.f32 %v92, %v98
    %vm100 = vcmp.eq.f32.partialorder %v92, inf
    %v101 = vsel %vm100, %v92, %v99
    %vm102 = vcmp.eq.f32.partialorder %v92, 0.0
    %v103 = vand.u32 %v92, 2147483648
    %v104 = vsel %vm102, %v103, %v101
    %v105 = vsub.f32 0.0, %v104
    %106 = vmax.xlane.f32.xlu0 %v105
    %v107 = vpop.xlane.xlu0 %106
    %v108 = vsub.f32 %v105, %v107
    %v109 = vmul.f32 %v108, 1.442695
    %v110 = vpow.pop %v109
    %111 = vadd.xlane.f32.xlu0 %v110
    %v112 = vpop.xlane.xlu0 %111
    %v113 = vrcp.pop %v112
    %v114 = vmul.f32 %v112, %v113
    %v115 = vsub.f32 1.0, %v114
    %v116 = vmul.f32 %v113, %v115
    %v117 = vadd.f32 %v113, %v116
    %vm118 = vweird.f32 %v112
    %vm119 = vweird.f32 %v113
    %vm120 = vmor %vm118, %vm119
    %v121 = vsel %vm120, %v113, %v117
    %v122 = vand.u32 2147483647, %v112
    %vm123 = vcmp.eq.f32.partialorder %v122, 8.507059e+37
    %v124 = vand.u32 %v112, 2147483648
    %v125 = vor.u32 1.1754944e-38, %v124
    %v126 = vsel %vm123, %v125, %v121
    %v127 = vmul.f32 %v110, %v126
    %128 = vst [vmem:[#allocation7] sm:$0xff] %v127
    // Predicated region
    $region22: #{tpu_custom_call.1} parent=1 // pred_check
      _
    $region23: #{tpu_custom_call.1} parent=1 // pred_check_branch
      %130 = sbr.rel (0) target = $region25
    $region24: #{tpu_custom_call.1} parent=1 // pred_region
      %132 = vsyncadd [#allocation4], 0
      %s134 = sshll.u32 [#allocation7], 4
      %s135 = int_to_ptr.vmem [resolvable:$true] %s134
      %s136 = sshll.u32 %s3, 4
      %s137 = int_to_ptr.hbm [resolvable:$true] %s136
      %139 = dma.vmem_to_hbm [thread:$0]  %s135, 128, %s137, [#allocation4]
    $region25: #{tpu_custom_call.1} parent=1 // pred_fallthru
      _
    // Predicated region
    $region26: #{tpu_custom_call.1} parent=1 // pred_check
      _
    $region27: #{tpu_custom_call.1} parent=1 // pred_check_branch
      %141 = sbr.rel (0) target = $region29
    $region28: #{tpu_custom_call.1} parent=1 // pred_region
      %143 = dma.done [#allocation4], 128
    $region29: #{tpu_custom_call.1} parent=1 // pred_fallthru
      _
    %144 = vsyncpa [#allocation3], 1
    %145 = vsyncpa [#allocation6], 1
    %146 = vsyncpa [#allocation4], 1

</llo_original>
